<compile_context>
chip_gen: v7x
topology: tpu7x:2x2x1
jax: 0.10.0
libtpu: 0.0.40
codegen_flags: <defaults>
</compile_context>

<pallas_src>
import math

import jax
import jax.numpy as jnp
from jax.experimental import pallas as pl
from jax.experimental.pallas import tpu as pltpu


def make_positional_encoding(max_len: int, d_model: int) -> jax.Array:
    """Deterministic buffer construction, identical math to the PyTorch __init__."""
    assert d_model % 2 == 0, "d_model must be even (same assumption as the PyTorch module)"
    position = jnp.arange(0, max_len, dtype=jnp.float32)[:, None]            # (max_len, 1)
    div_term = jnp.exp(
        jnp.arange(0, d_model, 2, dtype=jnp.float32) * (-math.log(10000.0) / d_model)
    )                                                                         # (D/2,)
    pe = jnp.zeros((max_len, d_model), dtype=jnp.float32)
    pe = pe.at[:, 0::2].set(jnp.sin(position * div_term))
    pe = pe.at[:, 1::2].set(jnp.cos(position * div_term))
    return pe                                                                 # (max_len, D) float32


# ----------------------------- kernels -----------------------------

def _pe_add_kernel_wide(x_ref, pe_ref, o_ref):
    # x_ref: (s_tile, B, D) in x.dtype; pe_ref: (s_tile, 1, D) float32.
    # Broadcasting pe over B is a sublane splat (layouts match).
    o_ref[...] = (x_ref[...].astype(jnp.float32) + pe_ref[...]).astype(o_ref.dtype)


def _make_flat_kernel(reps: int):
    # x_ref: (s_tile, B*D) in x.dtype; pe_ref: (s_tile, D) float32.
    def kernel(x_ref, pe_ref, o_ref):
        pe = pe_ref[...]
        if reps > 1:
            pe = jnp.tile(pe, (1, reps))          # lane-axis replication, VPU/XLU slack
        o_ref[...] = (x_ref[...].astype(jnp.float32) + pe).astype(o_ref.dtype)
    return kernel


# ----------------------------- planning -----------------------------

def _round_up(v: int, m: int) -> int:
    return ((v + m - 1) // m) * m


def _sublane(itemsize: int) -> int:
    return {4: 8, 2: 16, 1: 32}.get(itemsize, 8)


def _vmem_capacity_bytes() -> int:
    """Per-core VMEM capacity; conservative 64 MiB (v7x) fallback if unavailable."""
    try:
        cap = int(pltpu.get_tpu_info().vmem_capacity_bytes)
        if cap > 0:
            return cap
    except Exception:
        pass
    return 64 * 1024 * 1024


# Fraction of per-core VMEM targeted by the double-buffered working set.
_VMEM_TARGET_FRACTION = 0.65
# Below this element count a fused XLA add beats a custom call (launch + forced
# HBM round trip); raised per review — only large activations go through Pallas.
_PALLAS_MIN_ELEMS = 1 << 20


def positional_encoding_forward(x: jax.Array, pe_full: jax.Array,
                                *, force_pallas: bool = False,
                                s_tile: int | None = None) -> jax.Array:
    """x: (S, B, D); pe_full: (max_len, D) float32. Returns x + pe[:S] (dropout = identity)."""
    S, B, D = x.shape
    max_len, d_pe = pe_full.shape
    assert d_pe == D, f"pe d_model {d_pe} != x d_model {D}"
    assert S <= max_len, f"sequence length {S} exceeds max_len {max_len}"

    pe_full = pe_full.astype(jnp.float32)   # keep pe in f32; add in f32, cast on store

    def xla_path():
        return (x.astype(jnp.float32) + pe_full[:S][:, None, :]).astype(x.dtype)

    if not force_pallas and (x.size < _PALLAS_MIN_ELEMS or S < 8):
        return xla_path()

    itemsize = jnp.dtype(x.dtype).itemsize
    sub = _sublane(itemsize)
    capacity = _vmem_capacity_bytes()
    lane = lambda d: _round_up(d, 128)

    small_b = B < sub   # (s_tile, B, D) blocks would pad B up to `sub` sublanes

    # Bytes per sequence row of the padded VMEM tiles.
    if small_b:
        x_row = lane(B * D) * itemsize          # flattened (S, B*D) layout, s on sublanes
        pe_row = lane(D) * 4                    # (s_tile, D) f32, s on sublanes
    else:
        x_row = _round_up(B, sub) * lane(D) * itemsize
        pe_row = 8 * lane(D) * 4                # (s_tile, 1, D) f32: middle dim pads 1 -> 8

    if s_tile is None:
        target = int(capacity * _VMEM_TARGET_FRACTION)
        # Double-buffered: 2x x-in + 2x out + 2x pe  =>  (4*x_row + 2*pe_row) per s.
        s_tile = max(sub, (target // (4 * x_row + 2 * pe_row)) // sub * sub)
    if S < sub:
        s_tile = S                              # single full-extent block (allowed)
    else:
        s_tile = max(sub, min(int(s_tile), (S // sub) * sub))

    # Actual padded footprint for the chosen tile.
    if small_b:
        x_tile_b = _round_up(s_tile, sub) * lane(B * D) * itemsize
        pe_tile_b = _round_up(s_tile, 8) * lane(D) * 4
    else:
        x_tile_b = s_tile * _round_up(B, sub) * lane(D) * itemsize
        pe_tile_b = s_tile * 8 * lane(D) * 4
    needed = 4 * x_tile_b + 2 * pe_tile_b

    cap_limit = capacity - (8 << 20)            # always leave compiler scratch headroom
    if needed + (6 << 20) > cap_limit:
        return xla_path()                       # pathological shape: let XLA fuse it
    vmem_limit = int(min(cap_limit, max(16 << 20, needed + (6 << 20))))

    cost = pl.CostEstimate(
        flops=S * B * D,                                             # one add per element
        transcendentals=0,
        bytes_accessed=2 * S * B * D * itemsize + S * D * 4,         # x read + out write + pe read
    )
    compiler_params = pltpu.CompilerParams(
        dimension_semantics=("parallel",),      # lets multi-TC chips shard S-tiles
        vmem_limit_bytes=vmem_limit,
    )
    grid = (pl.cdiv(S, s_tile),)

    if small_b:
        # Free bitcast: merge trailing dims so sublanes are the dense S axis.
        x_flat = x.reshape(S, B * D)
        out = pl.pallas_call(
            _make_flat_kernel(B),
            out_shape=jax.ShapeDtypeStruct((S, B * D), x.dtype),
            grid=grid,
            in_specs=[
                pl.BlockSpec((s_tile, B * D), lambda i: (i, 0)),   # x: tiled over S
                pl.BlockSpec((s_tile, D), lambda i: (i, 0)),       # pe: windowed, f32
            ],
            out_specs=pl.BlockSpec((s_tile, B * D), lambda i: (i, 0)),
            compiler_params=compiler_params,
            cost_estimate=cost,
        )(x_flat, pe_full)
        return out.reshape(S, B, D)

    pe3 = pe_full[:, None, :]                   # (max_len, 1, D): layout-matching pe block
    return pl.pallas_call(
        _pe_add_kernel_wide,
        out_shape=jax.ShapeDtypeStruct((S, B, D), x.dtype),
        grid=grid,
        in_specs=[
            pl.BlockSpec((s_tile, B, D), lambda i: (i, 0, 0)),     # x: tiled over S
            pl.BlockSpec((s_tile, 1, D), lambda i: (i, 0, 0)),     # pe: windowed, f32
        ],
        out_specs=pl.BlockSpec((s_tile, B, D), lambda i: (i, 0, 0)),
        compiler_params=compiler_params,
        cost_estimate=cost,
    )(x, pe3)


if __name__ == "__main__":
    key = jax.random.PRNGKey(0)
    MAX_LEN = 64  # stand-in for max_len=5000 at small scale; math is identical

    # --- small-batch path (B < sublane count): flattened (S, B*D) kernel ---
    S, B, D = 8, 2, 32
    x = jax.random.normal(key, (S, B, D), dtype=jnp.float32)
    pe_full = make_positional_encoding(MAX_LEN, D)
    out = jax.block_until_ready(positional_encoding_forward(x, pe_full, force_pallas=True))
    ref = x + pe_full[:S][:, None, :]
    assert out.shape == (S, B, D)
    assert jnp.allclose(out, ref, atol=1e-6, rtol=1e-6), "small-B kernel mismatch vs reference"

    # --- wide-batch path (B >= sublane count): 3-D block, (s_tile,1,D) pe splat ---
    S2, B2, D2 = 16, 8, 128
    x2 = jax.random.normal(jax.random.PRNGKey(1), (S2, B2, D2), dtype=jnp.float32)
    pe2 = make_positional_encoding(MAX_LEN, D2)
    out2 = jax.block_until_ready(positional_encoding_forward(x2, pe2, force_pallas=True))
    ref2 = x2 + pe2[:S2][:, None, :]
    assert jnp.allclose(out2, ref2, atol=1e-6, rtol=1e-6), "wide-B kernel mismatch vs reference"

    # --- auto path: tiny input routes through the fused-XLA fallback ---
    out3 = jax.block_until_ready(positional_encoding_forward(x, pe_full))
    assert jnp.allclose(out3, ref, atol=1e-6, rtol=1e-6), "fallback mismatch vs reference"

    print("KERNEL_OK")
</pallas_src>

<mosaic_0001>
module attributes {stable_mosaic.version = 11 : i64} {
  func.func @kernel(%arg0: i32, %arg1: memref<8x64xf32, #tpu.memory_space<vmem>>, %arg2: memref<8x32xf32, #tpu.memory_space<vmem>>, %arg3: memref<8x64xf32, #tpu.memory_space<vmem>>) attributes {dimension_semantics = [#tpu.dimension_semantics<parallel>], iteration_bounds = array<i64: 1>, scalar_prefetch = 0 : i64, scratch_operands = 0 : i64, tpu.core_type = #tpu.core_type<tc>, window_params = [{transform_indices = @transform_0, window_bounds = array<i64: 8, 64>}, {transform_indices = @transform_1, window_bounds = array<i64: 8, 32>}, {transform_indices = @transform_2, window_bounds = array<i64: 8, 64>}]} {
    %c0 = arith.constant 0 : index
    %c0_0 = arith.constant 0 : index
    %0 = vector.load %arg2[%c0, %c0_0] : memref<8x32xf32, #tpu.memory_space<vmem>>, vector<8x32xf32>
    %1 = tpu.concatenate %0, %0 in 1 : vector<8x32xf32>, vector<8x32xf32> -> vector<8x64xf32>
    %c0_1 = arith.constant 0 : index
    %c0_2 = arith.constant 0 : index
    %2 = vector.load %arg1[%c0_1, %c0_2] : memref<8x64xf32, #tpu.memory_space<vmem>>, vector<8x64xf32>
    %3 = arith.addf %2, %1 : vector<8x64xf32>
    %c0_3 = arith.constant 0 : index
    %c0_4 = arith.constant 0 : index
    %4 = vector.load %arg3[%c0_3, %c0_4] : memref<8x64xf32, #tpu.memory_space<vmem>>, vector<8x64xf32>
    tpu.vector_store %arg3[%c0_3, %c0_4], %3 {strides = array<i32>} : memref<8x64xf32, #tpu.memory_space<vmem>>, vector<8x64xf32>,
    return
  }
  func.func @transform_0(%arg0: i32) -> (i32, i32) {
    %c0_i32 = arith.constant 0 : i32
    %c0_i32_0 = arith.constant 0 : i32
    return %arg0, %c0_i32 : i32, i32
  }
  func.func @transform_1(%arg0: i32) -> (i32, i32) {
    %c0_i32 = arith.constant 0 : i32
    %c0_i32_0 = arith.constant 0 : i32
    return %arg0, %c0_i32 : i32, i32
  }
  func.func @transform_2(%arg0: i32) -> (i32, i32) {
    %c0_i32 = arith.constant 0 : i32
    %c0_i32_0 = arith.constant 0 : i32
    return %arg0, %c0_i32 : i32, i32
  }
}

</mosaic_0001>

<llo_original>
// kernel: tpu_custom_call.1
$region0: #{tpu_custom_call.1}
  #allocation0 [shape = 'u32[]', space=smem, size = 0x4, offset = 0x4, fixed_abs, tag = 'smem constant byte address 0x4 - core index']
  #allocation1 [shape = 'u32[144,128]{1,0:T(1,128)}', space=vmem, size = 0x12000, scoped, tag = 'internal scratch']
  %s0 = inlined_call_operand.vmem [shape: f32[8,64], index: 0, kind: input, shape index: {}]
  %s1 = inlined_call_operand.vmem [shape: f32[64,32], index: 1, kind: input, shape index: {}]
  %s2 = inlined_call_operand.hbm [shape: f32[8,64], index: 2, kind: output, shape index: {}]
  %s3 = sld [smem:[#allocation0]]
  $region18: #{tpu_custom_call.1} parent=0
    _
  %s5 = ssub.s32 1, %s3
  %s6 = scalar_select 0, %s5, %s3
  $region1: #{tpu_custom_call.1} parent=0
    #allocation2 [shape = 'u8[4096]{0}', space=vmem, size = 0x1000, scoped, tag = 'output window, operand 0, single buffered']
    #allocation3 [shape = 's32[1]{0}', space=sflag, size = 0x4, scoped, tag = 'scoped memory for tpu_custom_call.1']
    %7 = vsyncpa [#allocation3], 0
    // Predicated region
    $region2: #{tpu_custom_call.1} parent=1 // pred_check
      _
    $region3: #{tpu_custom_call.1} parent=1 // pred_check_branch
      %9 = sbr.rel (0) target = $region5
    $region4: #{tpu_custom_call.1} parent=1 // pred_region
      _
    $region5: #{tpu_custom_call.1} parent=1 // pred_fallthru
      _
    // Predicated region
    $region6: #{tpu_custom_call.1} parent=1 // pred_check
      _
    $region7: #{tpu_custom_call.1} parent=1 // pred_check_branch
      %11 = sbr.rel (0) target = $region9
    $region8: #{tpu_custom_call.1} parent=1 // pred_region
      _
    $region9: #{tpu_custom_call.1} parent=1 // pred_fallthru
      _
    %v12 = vld [vmem:[%s1] sm:$0xff]
    %14 = vrot.lane.b32.xlu0 %v12, 32
    %v15 = vpop.permute.xlu0 %14
    %vm17 = vcmask 261120
    %v18 = vsel %vm17, %v12, %v15
    %v19 = vld [vmem:[%s0] sm:$0xff]
    %v20 = vadd.f32 %v19, %v18
    %vm21 = vcmask 523264
    %22 = vst.msk [vmem:[#allocation2] sm:$0xff] %vm21, %v20
    // Predicated region
    $region10: #{tpu_custom_call.1} parent=1 // pred_check
      _
    $region11: #{tpu_custom_call.1} parent=1 // pred_check_branch
      %24 = sbr.rel (0) target = $region13
    $region12: #{tpu_custom_call.1} parent=1 // pred_region
      %s26 = ssub.s32 128, 128
      %27 = vsyncadd [#allocation3], %s26
      %s29 = sshll.u32 [#allocation2], 4
      %s30 = int_to_ptr.vmem [resolvable:$true] %s29
      %32 = dma.vmem_to_hbm [thread:$0]  %s30, 128, %s2, [#allocation3]
    $region13: #{tpu_custom_call.1} parent=1 // pred_fallthru
      _
    // Predicated region
    $region14: #{tpu_custom_call.1} parent=1 // pred_check
      _
    $region15: #{tpu_custom_call.1} parent=1 // pred_check_branch
      %34 = sbr.rel (0) target = $region17
    $region16: #{tpu_custom_call.1} parent=1 // pred_region
      %35 = dma.done [#allocation3], 128
    $region17: #{tpu_custom_call.1} parent=1 // pred_fallthru
      _
    %36 = vsyncpa [#allocation3], 1

</llo_original>
